<compile_context>
chip_gen: v5e
topology: v5e:2x2
jax: 0.10.0
libtpu: 0.0.40
codegen_flags: <defaults>
</compile_context>

<pallas_src>
import jax
import jax.numpy as jnp
from jax.experimental import pallas as pl
from jax.experimental.pallas import tpu as pltpu

H1, H2 = 400, 300          # torch hidden sizes
H1P, H2P = 512, 384        # zero-padded, MXU/lane-friendly hidden sizes


def _round_up(a, m):
    return -(-a // m) * m


def _pad_to(a, shape):
    return jnp.pad(a, [(0, t - s) for s, t in zip(a.shape, shape)])


# ----------------------------- Pallas kernel --------------------------------

def _actor_kernel(x_ref, w1_ref, b1_ref, w2_ref, b2_ref, w3_ref, b3_ref, o_ref):
    # fc1: bf16 MXU matmul, f32 accumulate; bias + ReLU in f32 on the VPU.
    h = jnp.dot(x_ref[...], w1_ref[...], preferred_element_type=jnp.float32)
    h = jnp.maximum(h + b1_ref[...], 0.0)
    # fc2 (cast activations back to bf16 only for the MXU pass)
    h = jnp.dot(h.astype(jnp.bfloat16), w2_ref[...], preferred_element_type=jnp.float32)
    h = jnp.maximum(h + b2_ref[...], 0.0)
    # fc3 + Tanh (tanh uses the EUP slot, effectively free next to the matmuls)
    y = jnp.dot(h.astype(jnp.bfloat16), w3_ref[...], preferred_element_type=jnp.float32)
    y = y + b3_ref[...]
    # Output block is a full 128-lane group -> unmasked, lane-dense stores.
    o_ref[...] = jnp.tanh(y).astype(o_ref.dtype)


def actor_forward(params, x, *, row_tile=512):
    """Fused Actor forward: [B, K] -> [B, output_dim]."""
    B, K = x.shape
    w1, b1 = params["w1"], params["b1"]          # [K, 512] bf16, [1, 512] f32
    w2, b2 = params["w2"], params["b2"]          # [512, 384] bf16, [1, 384] f32
    w3, b3 = params["w3"], params["b3"]          # [384, Mp] bf16, [1, Mp] f32
    M = params["out_dim"]
    assert w1.shape[0] == K
    h1p, h2p, mp = w1.shape[1], w2.shape[1], w3.shape[1]

    # Row tile: for tiny batches a single small block (8-sublane multiple); for large
    # batches pick tb = round_up(cdiv(B, n_steps), 128) so padding stays bounded, tiles
    # are 128-row MXU-clean, and the 'parallel' grid has >= 2 steps (v7x megacore).
    if B <= 128:
        n_steps = 1
        tb = _round_up(B, 8)
    else:
        n_steps = max(2, -(-B // row_tile))
        tb = _round_up(-(-B // n_steps), 128)
    Bp = tb * n_steps

    xb = x.astype(jnp.bfloat16)                  # halve activation DMA traffic
    xp = xb if Bp == B else jnp.pad(xb, ((0, Bp - B), (0, 0)))

    # Advisory cost estimate so XLA schedules surrounding ops around this call.
    cost = pl.CostEstimate(
        flops=2 * Bp * (K * h1p + h1p * h2p + h2p * mp),
        transcendentals=Bp * mp,
        bytes_accessed=(2 * (Bp * K + K * h1p + h1p * h2p + h2p * mp)   # bf16
                        + 4 * (h1p + h2p + mp + Bp * mp)),              # f32
    )

    out = pl.pallas_call(
        _actor_kernel,
        out_shape=jax.ShapeDtypeStruct((Bp, mp), jnp.float32),
        grid=(n_steps,),
        in_specs=[
            pl.BlockSpec((tb, K), lambda i: (i, 0)),     # activations: row-tiled
            pl.BlockSpec((K, h1p), lambda i: (0, 0)),    # weights/biases: VMEM-resident
            pl.BlockSpec((1, h1p), lambda i: (0, 0)),
            pl.BlockSpec((h1p, h2p), lambda i: (0, 0)),
            pl.BlockSpec((1, h2p), lambda i: (0, 0)),
            pl.BlockSpec((h2p, mp), lambda i: (0, 0)),
            pl.BlockSpec((1, mp), lambda i: (0, 0)),
        ],
        out_specs=pl.BlockSpec((tb, mp), lambda i: (i, 0)),
        compiler_params=pltpu.CompilerParams(
            dimension_semantics=("parallel",)),          # megacore-shardable on v7x
        cost_estimate=cost,
    )(xp, w1, b1, w2, b2, w3, b3)
    return out[:B, :M]


# ------------------------- parameters (torch-shaped) -------------------------

def init_params_torch(key, input_dim, output_dim):
    """Deterministic synthetic parameters with the torch module's shapes ([out, in])."""
    ks = jax.random.split(key, 6)

    def u(k, shape, fan_in):
        bound = 1.0 / jnp.sqrt(jnp.float32(fan_in))
        return jax.random.uniform(k, shape, jnp.float32, -bound, bound)

    return dict(
        l1_w=u(ks[0], (H1, input_dim), input_dim), l1_b=u(ks[1], (H1,), input_dim),
        l2_w=u(ks[2], (H2, H1), H1),               l2_b=u(ks[3], (H2,), H1),
        l3_w=u(ks[4], (output_dim, H2), H2),       l3_b=u(ks[5], (output_dim,), H2),
    )


def prep_params(tp):
    """One-time layout shuffle: torch [out,in] -> [in,out], zero-pad 400->512 / 300->384,
    pad output dim to a full 128-lane group, cast weights to bf16 (biases stay f32)."""
    K = tp["l1_w"].shape[1]
    M = tp["l3_w"].shape[0]
    mp = _round_up(max(M, 1), 128)
    return dict(
        w1=_pad_to(jnp.asarray(tp["l1_w"]).T, (K, H1P)).astype(jnp.bfloat16),
        b1=_pad_to(jnp.asarray(tp["l1_b"]), (H1P,)).astype(jnp.float32).reshape(1, H1P),
        w2=_pad_to(jnp.asarray(tp["l2_w"]).T, (H1P, H2P)).astype(jnp.bfloat16),
        b2=_pad_to(jnp.asarray(tp["l2_b"]), (H2P,)).astype(jnp.float32).reshape(1, H2P),
        w3=_pad_to(jnp.asarray(tp["l3_w"]).T, (H2P, mp)).astype(jnp.bfloat16),
        b3=_pad_to(jnp.asarray(tp["l3_b"]), (mp,)).astype(jnp.float32).reshape(1, mp),
        out_dim=M,
    )


def actor_ref(tp, x):
    """Pure-JAX f32 reference matching the torch module."""
    h = jnp.maximum(x @ tp["l1_w"].T + tp["l1_b"], 0.0)
    h = jnp.maximum(h @ tp["l2_w"].T + tp["l2_b"], 0.0)
    return jnp.tanh(h @ tp["l3_w"].T + tp["l3_b"])


if __name__ == "__main__":
    INPUT_DIM, OUTPUT_DIM, BATCH = 32, 8, 2
    key = jax.random.PRNGKey(0)
    pkey, xkey = jax.random.split(key)

    torch_params = init_params_torch(pkey, INPUT_DIM, OUTPUT_DIM)
    params = prep_params(torch_params)
    x = jax.random.normal(xkey, (BATCH, INPUT_DIM), jnp.float32)

    out = actor_forward(params, x)
    out = jax.block_until_ready(out)
    assert out.shape == (BATCH, OUTPUT_DIM), out.shape

    ref = jax.block_until_ready(actor_ref(torch_params, x))
    # bf16 weights with f32 accumulation: ~1e-2-level agreement expected.
    assert jnp.allclose(out, ref, atol=2e-2, rtol=2e-2), "mismatch vs reference"

    print("KERNEL_OK")
</pallas_src>

<mosaic_0001>
module attributes {stable_mosaic.version = 11 : i64} {
  func.func @_actor_kernel(%arg0: i32, %arg1: memref<8x32xbf16, #tpu.memory_space<vmem>>, %arg2: memref<32x512xbf16, #tpu.memory_space<vmem>>, %arg3: memref<1x512xf32, #tpu.memory_space<vmem>>, %arg4: memref<512x384xbf16, #tpu.memory_space<vmem>>, %arg5: memref<1x384xf32, #tpu.memory_space<vmem>>, %arg6: memref<384x128xbf16, #tpu.memory_space<vmem>>, %arg7: memref<1x128xf32, #tpu.memory_space<vmem>>, %arg8: memref<8x128xf32, #tpu.memory_space<vmem>>) attributes {dimension_semantics = [#tpu.dimension_semantics<parallel>], iteration_bounds = array<i64: 1>, scalar_prefetch = 0 : i64, scratch_operands = 0 : i64, tpu.core_type = #tpu.core_type<tc>, window_params = [{transform_indices = @transform_0, window_bounds = array<i64: 8, 32>}, {pipeline_mode = #tpu.pipeline_mode<synchronous>, transform_indices = @transform_1, window_bounds = array<i64: 32, 512>}, {pipeline_mode = #tpu.pipeline_mode<synchronous>, transform_indices = @transform_2, window_bounds = array<i64: 1, 512>}, {pipeline_mode = #tpu.pipeline_mode<synchronous>, transform_indices = @transform_3, window_bounds = array<i64: 512, 384>}, {pipeline_mode = #tpu.pipeline_mode<synchronous>, transform_indices = @transform_4, window_bounds = array<i64: 1, 384>}, {pipeline_mode = #tpu.pipeline_mode<synchronous>, transform_indices = @transform_5, window_bounds = array<i64: 384, 128>}, {pipeline_mode = #tpu.pipeline_mode<synchronous>, transform_indices = @transform_6, window_bounds = array<i64: 1, 128>}, {transform_indices = @transform_7, window_bounds = array<i64: 8, 128>}]} {
    %c0 = arith.constant 0 : index
    %c0_0 = arith.constant 0 : index
    %0 = vector.load %arg1[%c0, %c0_0] : memref<8x32xbf16, #tpu.memory_space<vmem>>, vector<8x32xbf16>
    %c0_1 = arith.constant 0 : index
    %c0_2 = arith.constant 0 : index
    %1 = vector.load %arg2[%c0_1, %c0_2] : memref<32x512xbf16, #tpu.memory_space<vmem>>, vector<32x512xbf16>
    %cst = arith.constant dense<0.000000e+00> : vector<8x512xf32>
    %2 = tpu.matmul %0, %1, %cst {dimension_numbers = #tpu.dot_dimension_numbers<[1], [0], [0], [1], [0, 0, 1, 1], [], []>} : vector<8x32xbf16>, vector<32x512xbf16>, vector<8x512xf32> -> vector<8x512xf32>
    %c0_3 = arith.constant 0 : index
    %c0_4 = arith.constant 0 : index
    %3 = vector.load %arg3[%c0_3, %c0_4] : memref<1x512xf32, #tpu.memory_space<vmem>>, vector<1x512xf32>
    %4 = vector.broadcast %3 : vector<1x512xf32> to vector<8x512xf32>
    %5 = arith.addf %2, %4 : vector<8x512xf32>
    %cst_5 = arith.constant 0.000000e+00 : f32
    %6 = vector.broadcast %cst_5 : f32 to vector<8x512xf32>
    %7 = arith.maximumf %5, %6 : vector<8x512xf32>
    %8 = arith.truncf %7 : vector<8x512xf32> to vector<8x512xbf16>
    %c0_6 = arith.constant 0 : index
    %c0_7 = arith.constant 0 : index
    %9 = vector.load %arg4[%c0_6, %c0_7] : memref<512x384xbf16, #tpu.memory_space<vmem>>, vector<512x384xbf16>
    %cst_8 = arith.constant dense<0.000000e+00> : vector<8x384xf32>
    %10 = tpu.matmul %8, %9, %cst_8 {dimension_numbers = #tpu.dot_dimension_numbers<[1], [0], [0], [1], [0, 0, 1, 1], [], []>} : vector<8x512xbf16>, vector<512x384xbf16>, vector<8x384xf32> -> vector<8x384xf32>
    %c0_9 = arith.constant 0 : index
    %c0_10 = arith.constant 0 : index
    %11 = vector.load %arg5[%c0_9, %c0_10] : memref<1x384xf32, #tpu.memory_space<vmem>>, vector<1x384xf32>
    %12 = vector.broadcast %11 : vector<1x384xf32> to vector<8x384xf32>
    %13 = arith.addf %10, %12 : vector<8x384xf32>
    %cst_11 = arith.constant 0.000000e+00 : f32
    %14 = vector.broadcast %cst_11 : f32 to vector<8x384xf32>
    %15 = arith.maximumf %13, %14 : vector<8x384xf32>
    %16 = arith.truncf %15 : vector<8x384xf32> to vector<8x384xbf16>
    %c0_12 = arith.constant 0 : index
    %c0_13 = arith.constant 0 : index
    %17 = vector.load %arg6[%c0_12, %c0_13] : memref<384x128xbf16, #tpu.memory_space<vmem>>, vector<384x128xbf16>
    %cst_14 = arith.constant dense<0.000000e+00> : vector<8x128xf32>
    %18 = tpu.matmul %16, %17, %cst_14 {dimension_numbers = #tpu.dot_dimension_numbers<[1], [0], [0], [1], [0, 0, 1, 1], [], []>} : vector<8x384xbf16>, vector<384x128xbf16>, vector<8x128xf32> -> vector<8x128xf32>
    %c0_15 = arith.constant 0 : index
    %c0_16 = arith.constant 0 : index
    %19 = vector.load %arg7[%c0_15, %c0_16] : memref<1x128xf32, #tpu.memory_space<vmem>>, vector<1x128xf32>
    %20 = vector.broadcast %19 : vector<1x128xf32> to vector<8x128xf32>
    %21 = arith.addf %18, %20 : vector<8x128xf32>
    %22 = math.tanh %21 : vector<8x128xf32>
    %c0_17 = arith.constant 0 : index
    %c0_18 = arith.constant 0 : index
    %23 = vector.load %arg8[%c0_17, %c0_18] : memref<8x128xf32, #tpu.memory_space<vmem>>, vector<8x128xf32>
    tpu.vector_store %arg8[%c0_17, %c0_18], %22 {strides = array<i32>} : memref<8x128xf32, #tpu.memory_space<vmem>>, vector<8x128xf32>,
    return
  }
  func.func @transform_0(%arg0: i32) -> (i32, i32) {
    %c0_i32 = arith.constant 0 : i32
    %c0_i32_0 = arith.constant 0 : i32
    return %arg0, %c0_i32 : i32, i32
  }
  func.func @transform_1(%arg0: i32) -> (i32, i32) {
    %c0_i32 = arith.constant 0 : i32
    %c0_i32_0 = arith.constant 0 : i32
    %c0_i32_1 = arith.constant 0 : i32
    return %c0_i32, %c0_i32_0 : i32, i32
  }
  func.func @transform_2(%arg0: i32) -> (i32, i32) {
    %c0_i32 = arith.constant 0 : i32
    %c0_i32_0 = arith.constant 0 : i32
    %c0_i32_1 = arith.constant 0 : i32
    return %c0_i32, %c0_i32_0 : i32, i32
  }
  func.func @transform_3(%arg0: i32) -> (i32, i32) {
    %c0_i32 = arith.constant 0 : i32
    %c0_i32_0 = arith.constant 0 : i32
    %c0_i32_1 = arith.constant 0 : i32
    return %c0_i32, %c0_i32_0 : i32, i32
  }
  func.func @transform_4(%arg0: i32) -> (i32, i32) {
    %c0_i32 = arith.constant 0 : i32
    %c0_i32_0 = arith.constant 0 : i32
    %c0_i32_1 = arith.constant 0 : i32
    return %c0_i32, %c0_i32_0 : i32, i32
  }
  func.func @transform_5(%arg0: i32) -> (i32, i32) {
    %c0_i32 = arith.constant 0 : i32
    %c0_i32_0 = arith.constant 0 : i32
    %c0_i32_1 = arith.constant 0 : i32
    return %c0_i32, %c0_i32_0 : i32, i32
  }
  func.func @transform_6(%arg0: i32) -> (i32, i32) {
    %c0_i32 = arith.constant 0 : i32
    %c0_i32_0 = arith.constant 0 : i32
    %c0_i32_1 = arith.constant 0 : i32
    return %c0_i32, %c0_i32_0 : i32, i32
  }
  func.func @transform_7(%arg0: i32) -> (i32, i32) {
    %c0_i32 = arith.constant 0 : i32
    %c0_i32_0 = arith.constant 0 : i32
    return %arg0, %c0_i32 : i32, i32
  }
}

</mosaic_0001>

<llo_original>
// kernel: tpu_custom_call.1
$region0: #{tpu_custom_call.1}
  #allocation0 [shape = 'u32[]', space=smem, size = 0x4, offset = 0x4, fixed_abs, tag = 'smem constant byte address 0x4 - core index']
  #allocation1 [shape = 'u32[72,128]{1,0:T(1,128)}', space=vmem, size = 0x9000, scoped, tag = 'internal scratch']
  %s0 = inlined_call_operand.hbm [shape: bf16[8,32], index: 0, kind: input, shape index: {}]
  %s1 = inlined_call_operand.hbm [shape: bf16[32,512], index: 1, kind: input, shape index: {}]
  %s2 = inlined_call_operand.hbm [shape: f32[1,512], index: 2, kind: input, shape index: {}]
  %s3 = inlined_call_operand.hbm [shape: bf16[512,384], index: 3, kind: input, shape index: {}]
  %s4 = inlined_call_operand.vmem [shape: f32[1,384], index: 4, kind: input, shape index: {}]
  %s5 = inlined_call_operand.hbm [shape: bf16[384,128], index: 5, kind: input, shape index: {}]
  %s6 = inlined_call_operand.vmem [shape: f32[1,128], index: 6, kind: input, shape index: {}]
  %s7 = inlined_call_operand.hbm [shape: f32[8,128], index: 7, kind: output, shape index: {}]
  %s8 = sld [smem:[#allocation0]]
  $region58: #{tpu_custom_call.1} parent=0
    _
  %s10 = ssub.s32 1, %s8
  %s11 = scalar_select 0, %s10, %s8
  $region1: #{tpu_custom_call.1} parent=0
    #allocation2 [shape = 'u8[2048]{0}', space=vmem, size = 0x800, scoped, tag = 'input window, operand 0, single buffered']
    #allocation3 [shape = 's32[1]{0}', space=sflag, size = 0x4, scoped, tag = 'scoped memory for tpu_custom_call.1']
    #allocation4 [shape = 's32[1]{0}', space=sflag, size = 0x4, scoped, tag = 'scoped memory for tpu_custom_call.1']
    #allocation5 [shape = 'u8[32768]{0}', space=vmem, size = 0x8000, scoped, tag = 'input window, operand 1, single buffered']
    #allocation6 [shape = 's32[1]{0}', space=sflag, size = 0x4, scoped, tag = 'scoped memory for tpu_custom_call.1']
    #allocation7 [shape = 'u8[2048]{0}', space=vmem, size = 0x800, scoped, tag = 'input window, operand 2, single buffered']
    #allocation8 [shape = 'u8[393216]{0}', space=vmem, size = 0x60000, scoped, tag = 'input window, operand 3, single buffered']
    #allocation9 [shape = 's32[1]{0}', space=sflag, size = 0x4, scoped, tag = 'scoped memory for tpu_custom_call.1']
    #allocation10 [shape = 'u8[98304]{0}', space=vmem, size = 0x18000, scoped, tag = 'input window, operand 5, single buffered']
    #allocation11 [shape = 'u8[4096]{0}', space=vmem, size = 0x1000, scoped, tag = 'output window, operand 0, single buffered']
    %12 = vsyncpa [#allocation3], 0
    %13 = vsyncpa [#allocation6], 0
    %14 = vsyncpa [#allocation9], 0
    %15 = vsyncpa [#allocation4], 0
    // Predicated region
    $region2: #{tpu_custom_call.1} parent=1 // pred_check
      _
    $region3: #{tpu_custom_call.1} parent=1 // pred_check_branch
      %17 = sbr.rel (0) target = $region5
    $region4: #{tpu_custom_call.1} parent=1 // pred_region
      %19 = vsyncadd [#allocation3], 0
      %s21 = sshll.u32 %s0, 4
      %s22 = int_to_ptr.hbm [resolvable:$true] %s21
      %s23 = sshll.u32 [#allocation2], 4
      %s24 = int_to_ptr.vmem [resolvable:$true] %s23
      %26 = dma.hbm_to_vmem [thread:$0]  %s22, 64, %s24, [#allocation3]
    $region5: #{tpu_custom_call.1} parent=1 // pred_fallthru
      _
    // Predicated region
    $region6: #{tpu_custom_call.1} parent=1 // pred_check
      _
    $region7: #{tpu_custom_call.1} parent=1 // pred_check_branch
      %28 = sbr.rel (0) target = $region9
    $region8: #{tpu_custom_call.1} parent=1 // pred_region
      %30 = vsyncadd [#allocation6], 0
      %s31 = sshll.u32 %s1, 4
      %s32 = int_to_ptr.hbm [resolvable:$true] %s31
      %s33 = sshll.u32 [#allocation5], 4
      %s34 = int_to_ptr.vmem [resolvable:$true] %s33
      %39 = dma.hbm_to_vmem [thread:$0]  %s32, 1024, %s34, [#allocation6], 256, 256, 16
    $region9: #{tpu_custom_call.1} parent=1 // pred_fallthru
      _
    // Predicated region
    $region10: #{tpu_custom_call.1} parent=1 // pred_check
      _
    $region11: #{tpu_custom_call.1} parent=1 // pred_check_branch
      %41 = sbr.rel (0) target = $region13
    $region12: #{tpu_custom_call.1} parent=1 // pred_region
      %43 = vsyncadd [#allocation6], 0
      %s45 = sshll.u32 %s2, 4
      %s46 = int_to_ptr.hbm [resolvable:$true] %s45
      %s47 = sshll.u32 [#allocation7], 4
      %s48 = int_to_ptr.vmem [resolvable:$true] %s47
      %50 = dma.hbm_to_vmem [thread:$0]  %s46, 64, %s48, [#allocation6]
    $region13: #{tpu_custom_call.1} parent=1 // pred_fallthru
      _
    // Predicated region
    $region14: #{tpu_custom_call.1} parent=1 // pred_check
      _
    $region15: #{tpu_custom_call.1} parent=1 // pred_check_branch
      %52 = sbr.rel (0) target = $region17
    $region16: #{tpu_custom_call.1} parent=1 // pred_region
      %54 = vsyncadd [#allocation9], 0
      %s55 = sshll.u32 %s3, 4
      %s56 = int_to_ptr.hbm [resolvable:$true] %s55
      %s57 = sshll.u32 [#allocation8], 4
      %s58 = int_to_ptr.vmem [resolvable:$true] %s57
      %63 = dma.hbm_to_vmem [thread:$0]  %s56, 12288, %s58, [#allocation9], 192, 192, 12
    $region17: #{tpu_custom_call.1} parent=1 // pred_fallthru
      _
    // Predicated region
    $region18: #{tpu_custom_call.1} parent=1 // pred_check
      _
    $region19: #{tpu_custom_call.1} parent=1 // pred_check_branch
      %65 = sbr.rel (0) target = $region21
    $region20: #{tpu_custom_call.1} parent=1 // pred_region
      _
    $region21: #{tpu_custom_call.1} parent=1 // pred_fallthru
      _
    // Predicated region
    $region22: #{tpu_custom_call.1} parent=1 // pred_check
      _
    $region23: #{tpu_custom_call.1} parent=1 // pred_check_branch
      %67 = sbr.rel (0) target = $region25
    $region24: #{tpu_custom_call.1} parent=1 // pred_region
      %69 = vsyncadd [#allocation9], 0
      %s70 = sshll.u32 %s5, 4
      %s71 = int_to_ptr.hbm [resolvable:$true] %s70
      %s72 = sshll.u32 [#allocation10], 4
      %s73 = int_to_ptr.vmem [resolvable:$true] %s72
      %78 = dma.hbm_to_vmem [thread:$0]  %s71, 3072, %s73, [#allocation9], 64, 64, 4
    $region25: #{tpu_custom_call.1} parent=1 // pred_fallthru
      _
    // Predicated region
    $region26: #{tpu_custom_call.1} parent=1 // pred_check
      _
    $region27: #{tpu_custom_call.1} parent=1 // pred_check_branch
      %80 = sbr.rel (0) target = $region29
    $region28: #{tpu_custom_call.1} parent=1 // pred_region
      _
    $region29: #{tpu_custom_call.1} parent=1 // pred_fallthru
      _
    // Predicated region
    $region30: #{tpu_custom_call.1} parent=1 // pred_check
      _
    $region31: #{tpu_custom_call.1} parent=1 // pred_check_branch
      %82 = sbr.rel (0) target = $region33
    $region32: #{tpu_custom_call.1} parent=1 // pred_region
      %84 = dma.done [#allocation3], 64
    $region33: #{tpu_custom_call.1} parent=1 // pred_fallthru
      _
    // Predicated region
    $region34: #{tpu_custom_call.1} parent=1 // pred_check
      _
    $region35: #{tpu_custom_call.1} parent=1 // pred_check_branch
      %86 = sbr.rel (0) target = $region37
    $region36: #{tpu_custom_call.1} parent=1 // pred_region
      %88 = dma.done [#allocation6], 1024
    $region37: #{tpu_custom_call.1} parent=1 // pred_fallthru
      _
    // Predicated region
    $region38: #{tpu_custom_call.1} parent=1 // pred_check
      _
    $region39: #{tpu_custom_call.1} parent=1 // pred_check_branch
      %90 = sbr.rel (0) target = $region41
    $region40: #{tpu_custom_call.1} parent=1 // pred_region
      %92 = dma.done [#allocation6], 64
    $region41: #{tpu_custom_call.1} parent=1 // pred_fallthru
      _
    // Predicated region
    $region42: #{tpu_custom_call.1} parent=1 // pred_check
      _
    $region43: #{tpu_custom_call.1} parent=1 // pred_check_branch
      %94 = sbr.rel (0) target = $region45
    $region44: #{tpu_custom_call.1} parent=1 // pred_region
      %96 = dma.done [#allocation9], 12288
    $region45: #{tpu_custom_call.1} parent=1 // pred_fallthru
      _
    // Predicated region
    $region46: #{tpu_custom_call.1} parent=1 // pred_check
      _
    $region47: #{tpu_custom_call.1} parent=1 // pred_check_branch
      %98 = sbr.rel (0) target = $region49
    $region48: #{tpu_custom_call.1} parent=1 // pred_region
      %100 = dma.done [#allocation9], 3072
    $region49: #{tpu_custom_call.1} parent=1 // pred_fallthru
      _
    %v102 = vld [vmem:[#allocation2] sm:$0xf]
    %v103 = vld [vmem:[#allocation5] sm:$0xff]
    %v104 = vld [vmem:[#allocation5 + $0x8] sm:$0xff]
    %v105 = vld [vmem:[#allocation5 + $0x10] sm:$0xff]
    %v106 = vld [vmem:[#allocation5 + $0x18] sm:$0xff]
    %v107 = vld [vmem:[#allocation5 + $0x20] sm:$0xff]
    %v108 = vld [vmem:[#allocation5 + $0x28] sm:$0xff]
    %v109 = vld [vmem:[#allocation5 + $0x30] sm:$0xff]
    %v110 = vld [vmem:[#allocation5 + $0x38] sm:$0xff]
    %v111 = vld [vmem:[#allocation7] sm:$0xf]
    %v113 = vperm.slane %v111, 0
    %v114 = vperm.slane %v111, 1
    %v115 = vperm.slane %v111, 2
    %v116 = vperm.slane %v111, 3
    %v129 = vunpack.c.l.b16 %v103
    %v130 = vunpack.c.h.b16 %v103
    %v131 = vunpack.c.l.b16 %v104
    %v132 = vunpack.c.h.b16 %v104
    %v133 = vunpack.c.l.b16 %v105
    %v134 = vunpack.c.h.b16 %v105
    %v135 = vunpack.c.l.b16 %v106
    %v136 = vunpack.c.h.b16 %v106
    %v137 = vunpack.c.l.b16 %v107
    %v138 = vunpack.c.h.b16 %v107
    %v139 = vunpack.c.l.b16 %v108
    %v140 = vunpack.c.h.b16 %v108
    %v141 = vunpack.c.l.b16 %v109
    %v142 = vunpack.c.h.b16 %v109
    %v143 = vunpack.c.l.b16 %v110
    %v144 = vunpack.c.h.b16 %v110
    %v145 = vpack.c.b16 %v133, %v129
    %v146 = vpack.c.b16 %v134, %v130
    %v147 = vpack.c.b16 %v135, %v131
    %v148 = vpack.c.b16 %v136, %v132
    %v149 = vpack.c.b16 %v141, %v137
    %v150 = vpack.c.b16 %v142, %v138
    %v151 = vpack.c.b16 %v143, %v139
    %v152 = vpack.c.b16 %v144, %v140
    %vm161 = vcmask 261120
    %v163 = vsel %vm161, %v102, 0
    %165 = vmatpush.bf16.msra.mxu0 0
    %166 = vmatpush.bf16.msra.mxu0 0
    %167 = vmatpush.bf16.msra.mxu0 0
    %168 = vmatpush.bf16.msra.mxu0 0
    %169 = vmatpush.bf16.msra.mxu0 0
    %170 = vmatpush.bf16.msra.mxu0 0
    %171 = vmatpush.bf16.msra.mxu0 %v149
    %172 = vmatpush.bf16.msra.mxu0 %v145
    %173 = vmatmul.bf16.gmra.mxu0 %v163
    %v174 = vpop.f32.mrf.mxu0
    %v175 = vadd.f32 %v113, %v174
    %v176 = vpop.f32.mrf.mxu0
    %177 = vdwg.mxu0
    %178 = vmatpush.bf16.msra.mxu0 0
    %179 = vmatpush.bf16.msra.mxu0 0
    %180 = vmatpush.bf16.msra.mxu0 0
    %181 = vmatpush.bf16.msra.mxu0 0
    %182 = vmatpush.bf16.msra.mxu0 0
    %183 = vmatpush.bf16.msra.mxu0 0
    %184 = vmatpush.bf16.msra.mxu0 %v150
    %185 = vmatpush.bf16.msra.mxu0 %v146
    %186 = vmatmul.bf16.gmra.mxu0 %v163
    %v187 = vpop.f32.mrf.mxu0
    %v188 = vadd.f32 %v114, %v187
    %v189 = vpop.f32.mrf.mxu0
    %190 = vdwg.mxu0
    %191 = vmatpush.bf16.msra.mxu0 0
    %192 = vmatpush.bf16.msra.mxu0 0
    %193 = vmatpush.bf16.msra.mxu0 0
    %194 = vmatpush.bf16.msra.mxu0 0
    %195 = vmatpush.bf16.msra.mxu0 0
    %196 = vmatpush.bf16.msra.mxu0 0
    %197 = vmatpush.bf16.msra.mxu0 %v151
    %198 = vmatpush.bf16.msra.mxu0 %v147
    %199 = vmatmul.bf16.gmra.mxu0 %v163
    %v200 = vpop.f32.mrf.mxu0
    %v201 = vadd.f32 %v115, %v200
    %v202 = vpop.f32.mrf.mxu0
    %203 = vdwg.mxu0
    %204 = vmatpush.bf16.msra.mxu0 0
    %205 = vmatpush.bf16.msra.mxu0 0
    %206 = vmatpush.bf16.msra.mxu0 0
    %207 = vmatpush.bf16.msra.mxu0 0
    %208 = vmatpush.bf16.msra.mxu0 0
    %209 = vmatpush.bf16.msra.mxu0 0
    %210 = vmatpush.bf16.msra.mxu0 %v152
    %211 = vmatpush.bf16.msra.mxu0 %v148
    %212 = vmatmul.bf16.gmra.mxu0 %v163
    %v213 = vpop.f32.mrf.mxu0
    %v214 = vadd.f32 %v116, %v213
    %v215 = vpop.f32.mrf.mxu0
    %216 = vdwg.mxu0
    %v217 = vmax.f32 %v175, 0.0
    %v218 = vmax.f32 %v188, 0.0
    %v219 = vmax.f32 %v201, 0.0
    %v220 = vmax.f32 %v214, 0.0
    %v221 = vpack.c.bf16 %v217, %v217
    %v222 = vpack.c.bf16 %v218, %v218
    %v223 = vpack.c.bf16 %v219, %v219
    %v224 = vpack.c.bf16 %v220, %v220
    %v225 = vld [vmem:[#allocation8] sm:$0xff]
    %v226 = vld [vmem:[#allocation8 + $0x8] sm:$0xf]
    %v227 = vld [vmem:[#allocation8 + $0xc] sm:$0xff]
    %v228 = vld [vmem:[#allocation8 + $0x14] sm:$0xf]
    %v229 = vld [vmem:[#allocation8 + $0x18] sm:$0xff]
    %v230 = vld [vmem:[#allocation8 + $0x20] sm:$0xf]
    %v231 = vld [vmem:[#allocation8 + $0x24] sm:$0xff]
    %v232 = vld [vmem:[#allocation8 + $0x2c] sm:$0xf]
    %v233 = vld [vmem:[#allocation8 + $0x30] sm:$0xff]
    %v234 = vld [vmem:[#allocation8 + $0x38] sm:$0xf]
    %v235 = vld [vmem:[#allocation8 + $0x3c] sm:$0xff]
    %v236 = vld [vmem:[#allocation8 + $0x44] sm:$0xf]
    %v237 = vld [vmem:[#allocation8 + $0x48] sm:$0xff]
    %v238 = vld [vmem:[#allocation8 + $0x50] sm:$0xf]
    %v239 = vld [vmem:[#allocation8 + $0x54] sm:$0xff]
    %v240 = vld [vmem:[#allocation8 + $0x5c] sm:$0xf]
    %v241 = vld [vmem:[#allocation8 + $0x60] sm:$0xff]
    %v242 = vld [vmem:[#allocation8 + $0x68] sm:$0xf]
    %v243 = vld [vmem:[#allocation8 + $0x6c] sm:$0xff]
    %v244 = vld [vmem:[#allocation8 + $0x74] sm:$0xf]
    %v245 = vld [vmem:[#allocation8 + $0x78] sm:$0xff]
    %v246 = vld [vmem:[#allocation8 + $0x80] sm:$0xf]
    %v247 = vld [vmem:[#allocation8 + $0x84] sm:$0xff]
    %v248 = vld [vmem:[#allocation8 + $0x8c] sm:$0xf]
    %v249 = vld [vmem:[#allocation8 + $0x90] sm:$0xff]
    %v250 = vld [vmem:[#allocation8 + $0x98] sm:$0xf]
    %v251 = vld [vmem:[#allocation8 + $0x9c] sm:$0xff]
    %v252 = vld [vmem:[#allocation8 + $0xa4] sm:$0xf]
    %v253 = vld [vmem:[#allocation8 + $0xa8] sm:$0xff]
    %v254 = vld [vmem:[#allocation8 + $0xb0] sm:$0xf]
    %v255 = vld [vmem:[#allocation8 + $0xb4] sm:$0xff]
    %v256 = vld [vmem:[#allocation8 + $0xbc] sm:$0xf]
    %v257 = vld [vmem:[#allocation8 + $0xc0] sm:$0xff]
    %v258 = vld [vmem:[#allocation8 + $0xc8] sm:$0xf]
    %v259 = vld [vmem:[#allocation8 + $0xcc] sm:$0xff]
    %v260 = vld [vmem:[#allocation8 + $0xd4] sm:$0xf]
    %v261 = vld [vmem:[#allocation8 + $0xd8] sm:$0xff]
    %v262 = vld [vmem:[#allocation8 + $0xe0] sm:$0xf]
    %v263 = vld [vmem:[#allocation8 + $0xe4] sm:$0xff]
    %v264 = vld [vmem:[#allocation8 + $0xec] sm:$0xf]
    %v265 = vld [vmem:[#allocation8 + $0xf0] sm:$0xff]
    %v266 = vld [vmem:[#allocation8 + $0xf8] sm:$0xf]
    %v267 = vld [vmem:[#allocation8 + $0xfc] sm:$0xff]
    %v268 = vld [vmem:[#allocation8 + $0x104] sm:$0xf]
    %v269 = vld [vmem:[#allocation8 + $0x108] sm:$0xff]
    %v270 = vld [vmem:[#allocation8 + $0x110] sm:$0xf]
    %v271 = vld [vmem:[#allocation8 + $0x114] sm:$0xff]
    %v272 = vld [vmem:[#allocation8 + $0x11c] sm:$0xf]
    %v273 = vld [vmem:[#allocation8 + $0x120] sm:$0xff]
    %v274 = vld [vmem:[#allocation8 + $0x128] sm:$0xf]
    %v275 = vld [vmem:[#allocation8 + $0x12c] sm:$0xff]
    %v276 = vld [vmem:[#allocation8 + $0x134] sm:$0xf]
    %v277 = vld [vmem:[#allocation8 + $0x138] sm:$0xff]
    %v278 = vld [vmem:[#allocation8 + $0x140] sm:$0xf]
    %v279 = vld [vmem:[#allocation8 + $0x144] sm:$0xff]
    %v280 = vld [vmem:[#allocation8 + $0x14c] sm:$0xf]
    %v281 = vld [vmem:[#allocation8 + $0x150] sm:$0xff]
    %v282 = vld [vmem:[#allocation8 + $0x158] sm:$0xf]
    %v283 = vld [vmem:[#allocation8 + $0x15c] sm:$0xff]
    %v284 = vld [vmem:[#allocation8 + $0x164] sm:$0xf]
    %v285 = vld [vmem:[#allocation8 + $0x168] sm:$0xff]
    %v286 = vld [vmem:[#allocation8 + $0x170] sm:$0xf]
    %v287 = vld [vmem:[#allocation8 + $0x174] sm:$0xff]
    %v288 = vld [vmem:[#allocation8 + $0x17c] sm:$0xf]
    %v289 = vld [vmem:[#allocation8 + $0x180] sm:$0xff]
    %v290 = vld [vmem:[#allocation8 + $0x188] sm:$0xf]
    %v291 = vld [vmem:[#allocation8 + $0x18c] sm:$0xff]
    %v292 = vld [vmem:[#allocation8 + $0x194] sm:$0xf]
    %v293 = vld [vmem:[#allocation8 + $0x198] sm:$0xff]
    %v294 = vld [vmem:[#allocation8 + $0x1a0] sm:$0xf]
    %v295 = vld [vmem:[#allocation8 + $0x1a4] sm:$0xff]
    %v296 = vld [vmem:[#allocation8 + $0x1ac] sm:$0xf]
    %v297 = vld [vmem:[#allocation8 + $0x1b0] sm:$0xff]
    %v298 = vld [vmem:[#allocation8 + $0x1b8] sm:$0xf]
    %v299 = vld [vmem:[#allocation8 + $0x1bc] sm:$0xff]
    %v300 = vld [vmem:[#allocation8 + $0x1c4] sm:$0xf]
    %v301 = vld [vmem:[#allocation8 + $0x1c8] sm:$0xff]
    %v302 = vld [vmem:[#allocation8 + $0x1d0] sm:$0xf]
    %v303 = vld [vmem:[#allocation8 + $0x1d4] sm:$0xff]
    %v304 = vld [vmem:[#allocation8 + $0x1dc] sm:$0xf]
    %v305 = vld [vmem:[#allocation8 + $0x1e0] sm:$0xff]
    %v306 = vld [vmem:[#allocation8 + $0x1e8] sm:$0xf]
    %v307 = vld [vmem:[#allocation8 + $0x1ec] sm:$0xff]
    %v308 = vld [vmem:[#allocation8 + $0x1f4] sm:$0xf]
    %v309 = vld [vmem:[#allocation8 + $0x1f8] sm:$0xff]
    %v310 = vld [vmem:[#allocation8 + $0x200] sm:$0xf]
    %v311 = vld [vmem:[#allocation8 + $0x204] sm:$0xff]
    %v312 = vld [vmem:[#allocation8 + $0x20c] sm:$0xf]
    %v313 = vld [vmem:[#allocation8 + $0x210] sm:$0xff]
    %v314 = vld [vmem:[#allocation8 + $0x218] sm:$0xf]
    %v315 = vld [vmem:[#allocation8 + $0x21c] sm:$0xff]
    %v316 = vld [vmem:[#allocation8 + $0x224] sm:$0xf]
    %v317 = vld [vmem:[#allocation8 + $0x228] sm:$0xff]
    %v318 = vld [vmem:[#allocation8 + $0x230] sm:$0xf]
    %v319 = vld [vmem:[#allocation8 + $0x234] sm:$0xff]
    %v320 = vld [vmem:[#allocation8 + $0x23c] sm:$0xf]
    %v321 = vld [vmem:[#allocation8 + $0x240] sm:$0xff]
    %v322 = vld [vmem:[#allocation8 + $0x248] sm:$0xf]
    %v323 = vld [vmem:[#allocation8 + $0x24c] sm:$0xff]
    %v324 = vld [vmem:[#allocation8 + $0x254] sm:$0xf]
    %v325 = vld [vmem:[#allocation8 + $0x258] sm:$0xff]
    %v326 = vld [vmem:[#allocation8 + $0x260] sm:$0xf]
    %v327 = vld [vmem:[#allocation8 + $0x264] sm:$0xff]
    %v328 = vld [vmem:[#allocation8 + $0x26c] sm:$0xf]
    %v329 = vld [vmem:[#allocation8 + $0x270] sm:$0xff]
    %v330 = vld [vmem:[#allocation8 + $0x278] sm:$0xf]
    %v331 = vld [vmem:[#allocation8 + $0x27c] sm:$0xff]
    %v332 = vld [vmem:[#allocation8 + $0x284] sm:$0xf]
    %v333 = vld [vmem:[#allocation8 + $0x288] sm:$0xff]
    %v334 = vld [vmem:[#allocation8 + $0x290] sm:$0xf]
    %v335 = vld [vmem:[#allocation8 + $0x294] sm:$0xff]
    %v336 = vld [vmem:[#allocation8 + $0x29c] sm:$0xf]
    %v337 = vld [vmem:[#allocation8 + $0x2a0] sm:$0xff]
    %v338 = vld [vmem:[#allocation8 + $0x2a8] sm:$0xf]
    %v339 = vld [vmem:[#allocation8 + $0x2ac] sm:$0xff]
    %v340 = vld [vmem:[#allocation8 + $0x2b4] sm:$0xf]
    %v341 = vld [vmem:[#allocation8 + $0x2b8] sm:$0xff]
    %v342 = vld [vmem:[#allocation8 + $0x2c0] sm:$0xf]
    %v343 = vld [vmem:[#allocation8 + $0x2c4] sm:$0xff]
    %v344 = vld [vmem:[#allocation8 + $0x2cc] sm:$0xf]
    %v345 = vld [vmem:[#allocation8 + $0x2d0] sm:$0xff]
    %v346 = vld [vmem:[#allocation8 + $0x2d8] sm:$0xf]
    %v347 = vld [vmem:[#allocation8 + $0x2dc] sm:$0xff]
    %v348 = vld [vmem:[#allocation8 + $0x2e4] sm:$0xf]
    %v349 = vld [vmem:[#allocation8 + $0x2e8] sm:$0xff]
    %v350 = vld [vmem:[#allocation8 + $0x2f0] sm:$0xf]
    %v351 = vld [vmem:[#allocation8 + $0x2f4] sm:$0xff]
    %v352 = vld [vmem:[#allocation8 + $0x2fc] sm:$0xf]
    %v353 = vld [vmem:[%s4] sm:$0x7]
    %v355 = vperm.slane %v353, 0
    %v356 = vperm.slane %v353, 1
    %v357 = vperm.slane %v353, 2
    %v489 = vunpack.c.l.b16 %v225
    %v490 = vunpack.c.h.b16 %v225
    %v491 = vunpack.c.l.b16 %v226
    %v492 = vunpack.c.l.b16 %v227
    %v493 = vunpack.c.h.b16 %v227
    %v494 = vunpack.c.l.b16 %v228
    %v495 = vunpack.c.l.b16 %v229
    %v496 = vunpack.c.h.b16 %v229
    %v497 = vunpack.c.l.b16 %v230
    %v498 = vunpack.c.l.b16 %v231
    %v499 = vunpack.c.h.b16 %v231
    %v500 = vunpack.c.l.b16 %v232
    %v501 = vunpack.c.l.b16 %v233
    %v502 = vunpack.c.h.b16 %v233
    %v503 = vunpack.c.l.b16 %v234
    %v504 = vunpack.c.l.b16 %v235
    %v505 = vunpack.c.h.b16 %v235
    %v506 = vunpack.c.l.b16 %v236
    %v507 = vunpack.c.l.b16 %v237
    %v508 = vunpack.c.h.b16 %v237
    %v509 = vunpack.c.l.b16 %v238
    %v510 = vunpack.c.l.b16 %v239
    %v511 = vunpack.c.h.b16 %v239
    %v512 = vunpack.c.l.b16 %v240
    %v513 = vunpack.c.l.b16 %v241
    %v514 = vunpack.c.h.b16 %v241
    %v515 = vunpack.c.l.b16 %v242
    %v516 = vunpack.c.l.b16 %v243
    %v517 = vunpack.c.h.b16 %v243
    %v518 = vunpack.c.l.b16 %v244
    %v519 = vunpack.c.l.b16 %v245
    %v520 = vunpack.c.h.b16 %v245
    %v521 = vunpack.c.l.b16 %v246
    %v522 = vunpack.c.l.b16 %v247
    %v523 = vunpack.c.h.b16 %v247
    %v524 = vunpack.c.l.b16 %v248
    %v525 = vunpack.c.l.b16 %v249
    %v526 = vunpack.c.h.b16 %v249
    %v527 = vunpack.c.l.b16 %v250
    %v528 = vunpack.c.l.b16 %v251
    %v529 = vunpack.c.h.b16 %v251
    %v530 = vunpack.c.l.b16 %v252
    %v531 = vunpack.c.l.b16 %v253
    %v532 = vunpack.c.h.b16 %v253
    %v533 = vunpack.c.l.b16 %v254
    %v534 = vunpack.c.l.b16 %v255
    %v535 = vunpack.c.h.b16 %v255
    %v536 = vunpack.c.l.b16 %v256
    %v537 = vunpack.c.l.b16 %v257
    %v538 = vunpack.c.h.b16 %v257
    %v539 = vunpack.c.l.b16 %v258
    %v540 = vunpack.c.l.b16 %v259
    %v541 = vunpack.c.h.b16 %v259
    %v542 = vunpack.c.l.b16 %v260
    %v543 = vunpack.c.l.b16 %v261
    %v544 = vunpack.c.h.b16 %v261
    %v545 = vunpack.c.l.b16 %v262
    %v546 = vunpack.c.l.b16 %v263
    %v547 = vunpack.c.h.b16 %v263
    %v548 = vunpack.c.l.b16 %v264
    %v549 = vunpack.c.l.b16 %v265
    %v550 = vunpack.c.h.b16 %v265
    %v551 = vunpack.c.l.b16 %v266
    %v552 = vunpack.c.l.b16 %v267
    %v553 = vunpack.c.h.b16 %v267
    %v554 = vunpack.c.l.b16 %v268
    %v555 = vunpack.c.l.b16 %v269
    %v556 = vunpack.c.h.b16 %v269
    %v557 = vunpack.c.l.b16 %v270
    %v558 = vunpack.c.l.b16 %v271
    %v559 = vunpack.c.h.b16 %v271
    %v560 = vunpack.c.l.b16 %v272
    %v561 = vunpack.c.l.b16 %v273
    %v562 = vunpack.c.h.b16 %v273
    %v563 = vunpack.c.l.b16 %v274
    %v564 = vunpack.c.l.b16 %v275
    %v565 = vunpack.c.h.b16 %v275
    %v566 = vunpack.c.l.b16 %v276
    %v567 = vunpack.c.l.b16 %v277
    %v568 = vunpack.c.h.b16 %v277
    %v569 = vunpack.c.l.b16 %v278
    %v570 = vunpack.c.l.b16 %v279
    %v571 = vunpack.c.h.b16 %v279
    %v572 = vunpack.c.l.b16 %v280
    %v573 = vunpack.c.l.b16 %v281
    %v574 = vunpack.c.h.b16 %v281
    %v575 = vunpack.c.l.b16 %v282
    %v576 = vunpack.c.l.b16 %v283
    %v577 = vunpack.c.h.b16 %v283
    %v578 = vunpack.c.l.b16 %v284
    %v579 = vunpack.c.l.b16 %v285
    %v580 = vunpack.c.h.b16 %v285
    %v581 = vunpack.c.l.b16 %v286
    %v582 = vunpack.c.l.b16 %v287
    %v583 = vunpack.c.h.b16 %v287
    %v584 = vunpack.c.l.b16 %v288
    %v585 = vunpack.c.l.b16 %v289
    %v586 = vunpack.c.h.b16 %v289
    %v587 = vunpack.c.l.b16 %v290
    %v588 = vunpack.c.l.b16 %v291
    %v589 = vunpack.c.h.b16 %v291
    %v590 = vunpack.c.l.b16 %v292
    %v591 = vunpack.c.l.b16 %v293
    %v592 = vunpack.c.h.b16 %v293
    %v593 = vunpack.c.l.b16 %v294
    %v594 = vunpack.c.l.b16 %v295
    %v595 = vunpack.c.h.b16 %v295
    %v596 = vunpack.c.l.b16 %v296
    %v597 = vunpack.c.l.b16 %v297
    %v598 = vunpack.c.h.b16 %v297
    %v599 = vunpack.c.l.b16 %v298
    %v600 = vunpack.c.l.b16 %v299
    %v601 = vunpack.c.h.b16 %v299
    %v602 = vunpack.c.l.b16 %v300
    %v603 = vunpack.c.l.b16 %v301
    %v604 = vunpack.c.h.b16 %v301
    %v605 = vunpack.c.l.b16 %v302
    %v606 = vunpack.c.l.b16 %v303
    %v607 = vunpack.c.h.b16 %v303
    %v608 = vunpack.c.l.b16 %v304
    %v609 = vunpack.c.l.b16 %v305
    %v610 = vunpack.c.h.b16 %v305
    %v611 = vunpack.c.l.b16 %v306
    %v612 = vunpack.c.l.b16 %v307
    %v613 = vunpack.c.h.b16 %v307
    %v614 = vunpack.c.l.b16 %v308
    %v615 = vunpack.c.l.b16 %v309
    %v616 = vunpack.c.h.b16 %v309
    %v617 = vunpack.c.l.b16 %v310
    %v618 = vunpack.c.l.b16 %v311
    %v619 = vunpack.c.h.b16 %v311
    %v620 = vunpack.c.l.b16 %v312
    %v621 = vunpack.c.l.b16 %v313
    %v622 = vunpack.c.h.b16 %v313
    %v623 = vunpack.c.l.b16 %v314
    %v624 = vunpack.c.l.b16 %v315
    %v625 = vunpack.c.h.b16 %v315
    %v626 = vunpack.c.l.b16 %v316
    %v627 = vunpack.c.l.b16 %v317
    %v628 = vunpack.c.h.b16 %v317
    %v629 = vunpack.c.l.b16 %v318
    %v630 = vunpack.c.l.b16 %v319
    %v631 = vunpack.c.h.b16 %v319
    %v632 = vunpack.c.l.b16 %v320
    %v633 = vunpack.c.l.b16 %v321
    %v634 = vunpack.c.h.b16 %v321
    %v635 = vunpack.c.l.b16 %v322
    %v636 = vunpack.c.l.b16 %v323
    %v637 = vunpack.c.h.b16 %v323
    %v638 = vunpack.c.l.b16 %v324
    %v639 = vunpack.c.l.b16 %v325
    %v640 = vunpack.c.h.b16 %v325
    %v641 = vunpack.c.l.b16 %v326
    %v642 = vunpack.c.l.b16 %v327
    %v643 = vunpack.c.h.b16 %v327
    %v644 = vunpack.c.l.b16 %v328
    %v645 = vunpack.c.l.b16 %v329
    %v646 = vunpack.c.h.b16 %v329
    %v647 = vunpack.c.l.b16 %v330
    %v648 = vunpack.c.l.b16 %v331
    %v649 = vunpack.c.h.b16 %v331
    %v650 = vunpack.c.l.b16 %v332
    %v651 = vunpack.c.l.b16 %v333
    %v652 = vunpack.c.h.b16 %v333
    %v653 = vunpack.c.l.b16 %v334
    %v654 = vunpack.c.l.b16 %v335
    %v655 = vunpack.c.h.b16 %v335
    %v656 = vunpack.c.l.b16 %v336
    %v657 = vunpack.c.l.b16 %v337
    %v658 = vunpack.c.h.b16 %v337
    %v659 = vunpack.c.l.b16 %v338
    %v660 = vunpack.c.l.b16 %v339
    %v661 = vunpack.c.h.b16 %v339
    %v662 = vunpack.c.l.b16 %v340
    %v663 = vunpack.c.l.b16 %v341
    %v664 = vunpack.c.h.b16 %v341
    %v665 = vunpack.c.l.b16 %v342
    %v666 = vunpack.c.l.b16 %v343
    %v667 = vunpack.c.h.b16 %v343
    %v668 = vunpack.c.l.b16 %v344
    %v669 = vunpack.c.l.b16 %v345
    %v670 = vunpack.c.h.b16 %v345
    %v671 = vunpack.c.l.b16 %v346
    %v672 = vunpack.c.l.b16 %v347
    %v673 = vunpack.c.h.b16 %v347
    %v674 = vunpack.c.l.b16 %v348
    %v675 = vunpack.c.l.b16 %v349
    %v676 = vunpack.c.h.b16 %v349
    %v677 = vunpack.c.l.b16 %v350
    %v678 = vunpack.c.l.b16 %v351
    %v679 = vunpack.c.h.b16 %v351
    %v680 = vunpack.c.l.b16 %v352
    %v681 = vpack.c.b16 %v492, %v489
    %v682 = vpack.c.b16 %v493, %v490
    %v683 = vpack.c.b16 %v494, %v491
    %v684 = vpack.c.b16 %v498, %v495
    %v685 = vpack.c.b16 %v499, %v496
    %v686 = vpack.c.b16 %v500, %v497
    %v687 = vpack.c.b16 %v504, %v501
    %v688 = vpack.c.b16 %v505, %v502
    %v689 = vpack.c.b16 %v506, %v503
    %v690 = vpack.c.b16 %v510, %v507
    %v691 = vpack.c.b16 %v511, %v508
    %v692 = vpack.c.b16 %v512, %v509
    %v693 = vpack.c.b16 %v516, %v513
    %v694 = vpack.c.b16 %v517, %v514
    %v695 = vpack.c.b16 %v518, %v515
    %v696 = vpack.c.b16 %v522, %v519
    %v697 = vpack.c.b16 %v523, %v520
    %v698 = vpack.c.b16 %v524, %v521
    %v699 = vpack.c.b16 %v528, %v525
    %v700 = vpack.c.b16 %v529, %v526
    %v701 = vpack.c.b16 %v530, %v527
    %v702 = vpack.c.b16 %v534, %v531
    %v703 = vpack.c.b16 %v535, %v532
    %v704 = vpack.c.b16 %v536, %v533
    %v705 = vpack.c.b16 %v540, %v537
    %v706 = vpack.c.b16 %v541, %v538
    %v707 = vpack.c.b16 %v542, %v539
    %v708 = vpack.c.b16 %v546, %v543
    %v709 = vpack.c.b16 %v547, %v544
    %v710 = vpack.c.b16 %v548, %v545
    %v711 = vpack.c.b16 %v552, %v549
    %v712 = vpack.c.b16 %v553, %v550
    %v713 = vpack.c.b16 %v554, %v551
    %v714 = vpack.c.b16 %v558, %v555
    %v715 = vpack.c.b16 %v559, %v556
    %v716 = vpack.c.b16 %v560, %v557
    %v717 = vpack.c.b16 %v564, %v561
    %v718 = vpack.c.b16 %v565, %v562
    %v719 = vpack.c.b16 %v566, %v563
    %v720 = vpack.c.b16 %v570, %v567
    %v721 = vpack.c.b16 %v571, %v568
    %v722 = vpack.c.b16 %v572, %v569
    %v723 = vpack.c.b16 %v576, %v573
    %v724 = vpack.c.b16 %v577, %v574
    %v725 = vpack.c.b16 %v578, %v575
    %v726 = vpack.c.b16 %v582, %v579
    %v727 = vpack.c.b16 %v583, %v580
    %v728 = vpack.c.b16 %v584, %v581
    %v729 = vpack.c.b16 %v588, %v585
    %v730 = vpack.c.b16 %v589, %v586
    %v731 = vpack.c.b16 %v590, %v587
    %v732 = vpack.c.b16 %v594, %v591
    %v733 = vpack.c.b16 %v595, %v592
    %v734 = vpack.c.b16 %v596, %v593
    %v735 = vpack.c.b16 %v600, %v597
    %v736 = vpack.c.b16 %v601, %v598
    %v737 = vpack.c.b16 %v602, %v599
    %v738 = vpack.c.b16 %v606, %v603
    %v739 = vpack.c.b16 %v607, %v604
    %v740 = vpack.c.b16 %v608, %v605
    %v741 = vpack.c.b16 %v612, %v609
    %v742 = vpack.c.b16 %v613, %v610
    %v743 = vpack.c.b16 %v614, %v611
    %v744 = vpack.c.b16 %v618, %v615
    %v745 = vpack.c.b16 %v619, %v616
    %v746 = vpack.c.b16 %v620, %v617
    %v747 = vpack.c.b16 %v624, %v621
    %v748 = vpack.c.b16 %v625, %v622
    %v749 = vpack.c.b16 %v626, %v623
    %v750 = vpack.c.b16 %v630, %v627
    %v751 = vpack.c.b16 %v631, %v628
    %v752 = vpack.c.b16 %v632, %v629
    %v753 = vpack.c.b16 %v636, %v633
    %v754 = vpack.c.b16 %v637, %v634
    %v755 = vpack.c.b16 %v638, %v635
    %v756 = vpack.c.b16 %v642, %v639
    %v757 = vpack.c.b16 %v643, %v640
    %v758 = vpack.c.b16 %v644, %v641
    %v759 = vpack.c.b16 %v648, %v645
    %v760 = vpack.c.b16 %v649, %v646
    %v761 = vpack.c.b16 %v650, %v647
    %v762 = vpack.c.b16 %v654, %v651
    %v763 = vpack.c.b16 %v655, %v652
    %v764 = vpack.c.b16 %v656, %v653
    %v765 = vpack.c.b16 %v660, %v657
    %v766 = vpack.c.b16 %v661, %v658
    %v767 = vpack.c.b16 %v662, %v659
    %v768 = vpack.c.b16 %v666, %v663
    %v769 = vpack.c.b16 %v667, %v664
    %v770 = vpack.c.b16 %v668, %v665
    %v771 = vpack.c.b16 %v672, %v669
    %v772 = vpack.c.b16 %v673, %v670
    %v773 = vpack.c.b16 %v674, %v671
    %v774 = vpack.c.b16 %v678, %v675
    %v775 = vpack.c.b16 %v679, %v676
    %v776 = vpack.c.b16 %v680, %v677
    %873 = vmatpush.bf16.msra.mxu0 %v702
    %874 = vmatpush.bf16.msra.mxu0 %v699
    %875 = vmatpush.bf16.msra.mxu0 %v696
    %876 = vmatpush.bf16.msra.mxu0 %v693
    %877 = vmatpush.bf16.msra.mxu0 %v690
    %878 = vmatpush.bf16.msra.mxu0 %v687
    %879 = vmatpush.bf16.msra.mxu0 %v684
    %880 = vmatpush.bf16.msra.mxu0 %v681
    %881 = vmatmul.bf16.gmra.mxu0 %v221
    %v882 = vpop.f32.mrf.mxu0
    %v883 = vadd.f32 %v355, %v882
    %v884 = vpop.f32.mrf.mxu0
    %885 = vdwg.mxu0
    %886 = vmatpush.bf16.msra.mxu0 %v726
    %887 = vmatpush.bf16.msra.mxu0 %v723
    %888 = vmatpush.bf16.msra.mxu0 %v720
    %889 = vmatpush.bf16.msra.mxu0 %v717
    %890 = vmatpush.bf16.msra.mxu0 %v714
    %891 = vmatpush.bf16.msra.mxu0 %v711
    %892 = vmatpush.bf16.msra.mxu0 %v708
    %893 = vmatpush.bf16.msra.mxu0 %v705
    %894 = vmatmul.bf16.gmra.mxu0 %v222
    %v895 = vpop.f32.mrf.mxu0
    %v896 = vadd.f32 %v883, %v895
    %v897 = vpop.f32.mrf.mxu0
    %898 = vdwg.mxu0
    %899 = vmatpush.bf16.msra.mxu0 %v750
    %900 = vmatpush.bf16.msra.mxu0 %v747
    %901 = vmatpush.bf16.msra.mxu0 %v744
    %902 = vmatpush.bf16.msra.mxu0 %v741
    %903 = vmatpush.bf16.msra.mxu0 %v738
    %904 = vmatpush.bf16.msra.mxu0 %v735
    %905 = vmatpush.bf16.msra.mxu0 %v732
    %906 = vmatpush.bf16.msra.mxu0 %v729
    %907 = vmatmul.bf16.gmra.mxu0 %v223
    %v908 = vpop.f32.mrf.mxu0
    %v909 = vadd.f32 %v896, %v908
    %v910 = vpop.f32.mrf.mxu0
    %911 = vdwg.mxu0
    %912 = vmatpush.bf16.msra.mxu0 %v774
    %913 = vmatpush.bf16.msra.mxu0 %v771
    %914 = vmatpush.bf16.msra.mxu0 %v768
    %915 = vmatpush.bf16.msra.mxu0 %v765
    %916 = vmatpush.bf16.msra.mxu0 %v762
    %917 = vmatpush.bf16.msra.mxu0 %v759
    %918 = vmatpush.bf16.msra.mxu0 %v756
    %919 = vmatpush.bf16.msra.mxu0 %v753
    %920 = vmatmul.bf16.gmra.mxu0 %v224
    %v921 = vpop.f32.mrf.mxu0
    %v922 = vadd.f32 %v909, %v921
    %v923 = vpop.f32.mrf.mxu0
    %924 = vdwg.mxu0
    %925 = vmatpush.bf16.msra.mxu0 %v703
    %926 = vmatpush.bf16.msra.mxu0 %v700
    %927 = vmatpush.bf16.msra.mxu0 %v697
    %928 = vmatpush.bf16.msra.mxu0 %v694
    %929 = vmatpush.bf16.msra.mxu0 %v691
    %930 = vmatpush.bf16.msra.mxu0 %v688
    %931 = vmatpush.bf16.msra.mxu0 %v685
    %932 = vmatpush.bf16.msra.mxu0 %v682
    %933 = vmatmul.bf16.gmra.mxu0 %v221
    %v934 = vpop.f32.mrf.mxu0
    %v935 = vadd.f32 %v356, %v934
    %v936 = vpop.f32.mrf.mxu0
    %937 = vdwg.mxu0
    %938 = vmatpush.bf16.msra.mxu0 %v727
    %939 = vmatpush.bf16.msra.mxu0 %v724
    %940 = vmatpush.bf16.msra.mxu0 %v721
    %941 = vmatpush.bf16.msra.mxu0 %v718
    %942 = vmatpush.bf16.msra.mxu0 %v715
    %943 = vmatpush.bf16.msra.mxu0 %v712
    %944 = vmatpush.bf16.msra.mxu0 %v709
    %945 = vmatpush.bf16.msra.mxu0 %v706
    %946 = vmatmul.bf16.gmra.mxu0 %v222
    %v947 = vpop.f32.mrf.mxu0
    %v948 = vadd.f32 %v935, %v947
    %v949 = vpop.f32.mrf.mxu0
    %950 = vdwg.mxu0
    %951 = vmatpush.bf16.msra.mxu0 %v751
    %952 = vmatpush.bf16.msra.mxu0 %v748
    %953 = vmatpush.bf16.msra.mxu0 %v745
    %954 = vmatpush.bf16.msra.mxu0 %v742
    %955 = vmatpush.bf16.msra.mxu0 %v739
    %956 = vmatpush.bf16.msra.mxu0 %v736
    %957 = vmatpush.bf16.msra.mxu0 %v733
    %958 = vmatpush.bf16.msra.mxu0 %v730
    %959 = vmatmul.bf16.gmra.mxu0 %v223
    %v960 = vpop.f32.mrf.mxu0
    %v961 = vadd.f32 %v948, %v960
    %v962 = vpop.f32.mrf.mxu0
    %963 = vdwg.mxu0
    %964 = vmatpush.bf16.msra.mxu0 %v775
    %965 = vmatpush.bf16.msra.mxu0 %v772
    %966 = vmatpush.bf16.msra.mxu0 %v769
    %967 = vmatpush.bf16.msra.mxu0 %v766
    %968 = vmatpush.bf16.msra.mxu0 %v763
    %969 = vmatpush.bf16.msra.mxu0 %v760
    %970 = vmatpush.bf16.msra.mxu0 %v757
    %971 = vmatpush.bf16.msra.mxu0 %v754
    %972 = vmatmul.bf16.gmra.mxu0 %v224
    %v973 = vpop.f32.mrf.mxu0
    %v974 = vadd.f32 %v961, %v973
    %v975 = vpop.f32.mrf.mxu0
    %976 = vdwg.mxu0
    %977 = vmatpush.bf16.msra.mxu0 %v704
    %978 = vmatpush.bf16.msra.mxu0 %v701
    %979 = vmatpush.bf16.msra.mxu0 %v698
    %980 = vmatpush.bf16.msra.mxu0 %v695
    %981 = vmatpush.bf16.msra.mxu0 %v692
    %982 = vmatpush.bf16.msra.mxu0 %v689
    %983 = vmatpush.bf16.msra.mxu0 %v686
    %984 = vmatpush.bf16.msra.mxu0 %v683
    %985 = vmatmul.bf16.gmra.mxu0 %v221
    %v986 = vpop.f32.mrf.mxu0
    %v987 = vadd.f32 %v357, %v986
    %v988 = vpop.f32.mrf.mxu0
    %989 = vdwg.mxu0
    %990 = vmatpush.bf16.msra.mxu0 %v728
    %991 = vmatpush.bf16.msra.mxu0 %v725
    %992 = vmatpush.bf16.msra.mxu0 %v722
    %993 = vmatpush.bf16.msra.mxu0 %v719
    %994 = vmatpush.bf16.msra.mxu0 %v716
    %995 = vmatpush.bf16.msra.mxu0 %v713
    %996 = vmatpush.bf16.msra.mxu0 %v710
    %997 = vmatpush.bf16.msra.mxu0 %v707
    %998 = vmatmul.bf16.gmra.mxu0 %v222
    %v999 = vpop.f32.mrf.mxu0
    %v1000 = vadd.f32 %v987, %v999
    %v1001 = vpop.f32.mrf.mxu0
    %1002 = vdwg.mxu0
    %1003 = vmatpush.bf16.msra.mxu0 %v752
    %1004 = vmatpush.bf16.msra.mxu0 %v749
    %1005 = vmatpush.bf16.msra.mxu0 %v746
    %1006 = vmatpush.bf16.msra.mxu0 %v743
    %1007 = vmatpush.bf16.msra.mxu0 %v740
    %1008 = vmatpush.bf16.msra.mxu0 %v737
    %1009 = vmatpush.bf16.msra.mxu0 %v734
    %1010 = vmatpush.bf16.msra.mxu0 %v731
    %1011 = vmatmul.bf16.gmra.mxu0 %v223
    %v1012 = vpop.f32.mrf.mxu0
    %v1013 = vadd.f32 %v1000, %v1012
    %v1014 = vpop.f32.mrf.mxu0
    %1015 = vdwg.mxu0
    %1016 = vmatpush.bf16.msra.mxu0 %v776
    %1017 = vmatpush.bf16.msra.mxu0 %v773
    %1018 = vmatpush.bf16.msra.mxu0 %v770
    %1019 = vmatpush.bf16.msra.mxu0 %v767
    %1020 = vmatpush.bf16.msra.mxu0 %v764
    %1021 = vmatpush.bf16.msra.mxu0 %v761
    %1022 = vmatpush.bf16.msra.mxu0 %v758
    %1023 = vmatpush.bf16.msra.mxu0 %v755
    %1024 = vmatmul.bf16.gmra.mxu0 %v224
    %v1025 = vpop.f32.mrf.mxu0
    %v1026 = vadd.f32 %v1013, %v1025
    %v1027 = vpop.f32.mrf.mxu0
    %1028 = vdwg.mxu0
    %v1029 = vmax.f32 %v922, 0.0
    %v1030 = vmax.f32 %v974, 0.0
    %v1031 = vmax.f32 %v1026, 0.0
    %v1032 = vpack.c.bf16 %v1029, %v1029
    %v1033 = vpack.c.bf16 %v1030, %v1030
    %v1034 = vpack.c.bf16 %v1031, %v1031
    %v1035 = vld [vmem:[#allocation10] sm:$0xf]
    %v1036 = vld [vmem:[#allocation10 + $0x4] sm:$0xf]
    %v1037 = vld [vmem:[#allocation10 + $0x8] sm:$0xf]
    %v1038 = vld [vmem:[#allocation10 + $0xc] sm:$0xf]
    %v1039 = vld [vmem:[#allocation10 + $0x10] sm:$0xf]
    %v1040 = vld [vmem:[#allocation10 + $0x14] sm:$0xf]
    %v1041 = vld [vmem:[#allocation10 + $0x18] sm:$0xf]
    %v1042 = vld [vmem:[#allocation10 + $0x1c] sm:$0xf]
    %v1043 = vld [vmem:[#allocation10 + $0x20] sm:$0xf]
    %v1044 = vld [vmem:[#allocation10 + $0x24] sm:$0xf]
    %v1045 = vld [vmem:[#allocation10 + $0x28] sm:$0xf]
    %v1046 = vld [vmem:[#allocation10 + $0x2c] sm:$0xf]
    %v1047 = vld [vmem:[#allocation10 + $0x30] sm:$0xf]
    %v1048 = vld [vmem:[#allocation10 + $0x34] sm:$0xf]
    %v1049 = vld [vmem:[#allocation10 + $0x38] sm:$0xf]
    %v1050 = vld [vmem:[#allocation10 + $0x3c] sm:$0xf]
    %v1051 = vld [vmem:[#allocation10 + $0x40] sm:$0xf]
    %v1052 = vld [vmem:[#allocation10 + $0x44] sm:$0xf]
    %v1053 = vld [vmem:[#allocation10 + $0x48] sm:$0xf]
    %v1054 = vld [vmem:[#allocation10 + $0x4c] sm:$0xf]
    %v1055 = vld [vmem:[#allocation10 + $0x50] sm:$0xf]
    %v1056 = vld [vmem:[#allocation10 + $0x54] sm:$0xf]
    %v1057 = vld [vmem:[#allocation10 + $0x58] sm:$0xf]
    %v1058 = vld [vmem:[#allocation10 + $0x5c] sm:$0xf]
    %v1059 = vld [vmem:[#allocation10 + $0x60] sm:$0xf]
    %v1060 = vld [vmem:[#allocation10 + $0x64] sm:$0xf]
    %v1061 = vld [vmem:[#allocation10 + $0x68] sm:$0xf]
    %v1062 = vld [vmem:[#allocation10 + $0x6c] sm:$0xf]
    %v1063 = vld [vmem:[#allocation10 + $0x70] sm:$0xf]
    %v1064 = vld [vmem:[#allocation10 + $0x74] sm:$0xf]
    %v1065 = vld [vmem:[#allocation10 + $0x78] sm:$0xf]
    %v1066 = vld [vmem:[#allocation10 + $0x7c] sm:$0xf]
    %v1067 = vld [vmem:[#allocation10 + $0x80] sm:$0xf]
    %v1068 = vld [vmem:[#allocation10 + $0x84] sm:$0xf]
    %v1069 = vld [vmem:[#allocation10 + $0x88] sm:$0xf]
    %v1070 = vld [vmem:[#allocation10 + $0x8c] sm:$0xf]
    %v1071 = vld [vmem:[#allocation10 + $0x90] sm:$0xf]
    %v1072 = vld [vmem:[#allocation10 + $0x94] sm:$0xf]
    %v1073 = vld [vmem:[#allocation10 + $0x98] sm:$0xf]
    %v1074 = vld [vmem:[#allocation10 + $0x9c] sm:$0xf]
    %v1075 = vld [vmem:[#allocation10 + $0xa0] sm:$0xf]
    %v1076 = vld [vmem:[#allocation10 + $0xa4] sm:$0xf]
    %v1077 = vld [vmem:[#allocation10 + $0xa8] sm:$0xf]
    %v1078 = vld [vmem:[#allocation10 + $0xac] sm:$0xf]
    %v1079 = vld [vmem:[#allocation10 + $0xb0] sm:$0xf]
    %v1080 = vld [vmem:[#allocation10 + $0xb4] sm:$0xf]
    %v1081 = vld [vmem:[#allocation10 + $0xb8] sm:$0xf]
    %v1082 = vld [vmem:[#allocation10 + $0xbc] sm:$0xf]
    %v1083 = vld [vmem:[%s6] sm:$0x1]
    %v1085 = vperm.slane %v1083, 0
    %v1135 = vunpack.c.l.b16 %v1035
    %v1136 = vunpack.c.l.b16 %v1036
    %v1137 = vunpack.c.l.b16 %v1037
    %v1138 = vunpack.c.l.b16 %v1038
    %v1139 = vunpack.c.l.b16 %v1039
    %v1140 = vunpack.c.l.b16 %v1040
    %v1141 = vunpack.c.l.b16 %v1041
    %v1142 = vunpack.c.l.b16 %v1042
    %v1143 = vunpack.c.l.b16 %v1043
    %v1144 = vunpack.c.l.b16 %v1044
    %v1145 = vunpack.c.l.b16 %v1045
    %v1146 = vunpack.c.l.b16 %v1046
    %v1147 = vunpack.c.l.b16 %v1047
    %v1148 = vunpack.c.l.b16 %v1048
    %v1149 = vunpack.c.l.b16 %v1049
    %v1150 = vunpack.c.l.b16 %v1050
    %v1151 = vunpack.c.l.b16 %v1051
    %v1152 = vunpack.c.l.b16 %v1052
    %v1153 = vunpack.c.l.b16 %v1053
    %v1154 = vunpack.c.l.b16 %v1054
    %v1155 = vunpack.c.l.b16 %v1055
    %v1156 = vunpack.c.l.b16 %v1056
    %v1157 = vunpack.c.l.b16 %v1057
    %v1158 = vunpack.c.l.b16 %v1058
    %v1159 = vunpack.c.l.b16 %v1059
    %v1160 = vunpack.c.l.b16 %v1060
    %v1161 = vunpack.c.l.b16 %v1061
    %v1162 = vunpack.c.l.b16 %v1062
    %v1163 = vunpack.c.l.b16 %v1063
    %v1164 = vunpack.c.l.b16 %v1064
    %v1165 = vunpack.c.l.b16 %v1065
    %v1166 = vunpack.c.l.b16 %v1066
    %v1167 = vunpack.c.l.b16 %v1067
    %v1168 = vunpack.c.l.b16 %v1068
    %v1169 = vunpack.c.l.b16 %v1069
    %v1170 = vunpack.c.l.b16 %v1070
    %v1171 = vunpack.c.l.b16 %v1071
    %v1172 = vunpack.c.l.b16 %v1072
    %v1173 = vunpack.c.l.b16 %v1073
    %v1174 = vunpack.c.l.b16 %v1074
    %v1175 = vunpack.c.l.b16 %v1075
    %v1176 = vunpack.c.l.b16 %v1076
    %v1177 = vunpack.c.l.b16 %v1077
    %v1178 = vunpack.c.l.b16 %v1078
    %v1179 = vunpack.c.l.b16 %v1079
    %v1180 = vunpack.c.l.b16 %v1080
    %v1181 = vunpack.c.l.b16 %v1081
    %v1182 = vunpack.c.l.b16 %v1082
    %v1183 = vpack.c.b16 %v1136, %v1135
    %v1184 = vpack.c.b16 %v1138, %v1137
    %v1185 = vpack.c.b16 %v1140, %v1139
    %v1186 = vpack.c.b16 %v1142, %v1141
    %v1187 = vpack.c.b16 %v1144, %v1143
    %v1188 = vpack.c.b16 %v1146, %v1145
    %v1189 = vpack.c.b16 %v1148, %v1147
    %v1190 = vpack.c.b16 %v1150, %v1149
    %v1191 = vpack.c.b16 %v1152, %v1151
    %v1192 = vpack.c.b16 %v1154, %v1153
    %v1193 = vpack.c.b16 %v1156, %v1155
    %v1194 = vpack.c.b16 %v1158, %v1157
    %v1195 = vpack.c.b16 %v1160, %v1159
    %v1196 = vpack.c.b16 %v1162, %v1161
    %v1197 = vpack.c.b16 %v1164, %v1163
    %v1198 = vpack.c.b16 %v1166, %v1165
    %v1199 = vpack.c.b16 %v1168, %v1167
    %v1200 = vpack.c.b16 %v1170, %v1169
    %v1201 = vpack.c.b16 %v1172, %v1171
    %v1202 = vpack.c.b16 %v1174, %v1173
    %v1203 = vpack.c.b16 %v1176, %v1175
    %v1204 = vpack.c.b16 %v1178, %v1177
    %v1205 = vpack.c.b16 %v1180, %v1179
    %v1206 = vpack.c.b16 %v1182, %v1181
    %1231 = vmatpush.bf16.msra.mxu0 %v1190
    %1232 = vmatpush.bf16.msra.mxu0 %v1189
    %1233 = vmatpush.bf16.msra.mxu0 %v1188
    %1234 = vmatpush.bf16.msra.mxu0 %v1187
    %1235 = vmatpush.bf16.msra.mxu0 %v1186
    %1236 = vmatpush.bf16.msra.mxu0 %v1185
    %1237 = vmatpush.bf16.msra.mxu0 %v1184
    %1238 = vmatpush.bf16.msra.mxu0 %v1183
    %1239 = vmatmul.bf16.gmra.mxu0 %v1032
    %v1240 = vpop.f32.mrf.mxu0
    %v1241 = vadd.f32 %v1085, %v1240
    %v1242 = vpop.f32.mrf.mxu0
    %1243 = vdwg.mxu0
    %1244 = vmatpush.bf16.msra.mxu0 %v1198
    %1245 = vmatpush.bf16.msra.mxu0 %v1197
    %1246 = vmatpush.bf16.msra.mxu0 %v1196
    %1247 = vmatpush.bf16.msra.mxu0 %v1195
    %1248 = vmatpush.bf16.msra.mxu0 %v1194
    %1249 = vmatpush.bf16.msra.mxu0 %v1193
    %1250 = vmatpush.bf16.msra.mxu0 %v1192
    %1251 = vmatpush.bf16.msra.mxu0 %v1191
    %1252 = vmatmul.bf16.gmra.mxu0 %v1033
    %v1253 = vpop.f32.mrf.mxu0
    %v1254 = vadd.f32 %v1241, %v1253
    %v1255 = vpop.f32.mrf.mxu0
    %1256 = vdwg.mxu0
    %1257 = vmatpush.bf16.msra.mxu0 %v1206
    %1258 = vmatpush.bf16.msra.mxu0 %v1205
    %1259 = vmatpush.bf16.msra.mxu0 %v1204
    %1260 = vmatpush.bf16.msra.mxu0 %v1203
    %1261 = vmatpush.bf16.msra.mxu0 %v1202
    %1262 = vmatpush.bf16.msra.mxu0 %v1201
    %1263 = vmatpush.bf16.msra.mxu0 %v1200
    %1264 = vmatpush.bf16.msra.mxu0 %v1199
    %1265 = vmatmul.bf16.gmra.mxu0 %v1034
    %v1266 = vpop.f32.mrf.mxu0
    %v1267 = vadd.f32 %v1254, %v1266
    %v1268 = vpop.f32.mrf.mxu0
    %1269 = vdwg.mxu0
    %v1270 = vtanh.pop %v1267
    %1271 = vst [vmem:[#allocation11] sm:$0xff] %v1270
    // Predicated region
    $region50: #{tpu_custom_call.1} parent=1 // pred_check
      _
    $region51: #{tpu_custom_call.1} parent=1 // pred_check_branch
      %1273 = sbr.rel (0) target = $region53
    $region52: #{tpu_custom_call.1} parent=1 // pred_region
      %1275 = vsyncadd [#allocation4], 0
      %s1277 = sshll.u32 [#allocation11], 4
      %s1278 = int_to_ptr.vmem [resolvable:$true] %s1277
      %s1279 = sshll.u32 %s7, 4
      %s1280 = int_to_ptr.hbm [resolvable:$true] %s1279
      %1282 = dma.vmem_to_hbm [thread:$0]  %s1278, 128, %s1280, [#allocation4]
    $region53: #{tpu_custom_call.1} parent=1 // pred_fallthru
      _
    // Predicated region
    $region54: #{tpu_custom_call.1} parent=1 // pred_check
      _
    $region55: #{tpu_custom_call.1} parent=1 // pred_check_branch
      %1284 = sbr.rel (0) target = $region57
    $region56: #{tpu_custom_call.1} parent=1 // pred_region
      %1286 = dma.done [#allocation4], 128
    $region57: #{tpu_custom_call.1} parent=1 // pred_fallthru
      _
    %1287 = vsyncpa [#allocation3], 1
    %1288 = vsyncpa [#allocation6], 1
    %1289 = vsyncpa [#allocation9], 1
    %1290 = vsyncpa [#allocation4], 1

</llo_original>
